<compile_context>
chip_gen: v6e
topology: v6e:2x2x1
jax: 0.10.0
libtpu: 0.0.40
codegen_flags: <defaults>
</compile_context>

<pallas_src>
import jax
import jax.numpy as jnp
from jax.experimental import pallas as pl
from jax.experimental.pallas import tpu as pltpu  # noqa: F401  (TPU backend)

EPS = 1e-3  # BatchNorm2d eps=0.001


def conv_bn_add_kernel(w_ref, x_ref, gb_ref, res_ref, o_ref):
    # 1x1 conv == matmul on the MXU, f32 accumulation: [Cout, Cin] @ [Cin, HW].
    y = jnp.dot(w_ref[...], x_ref[...], preferred_element_type=jnp.float32)  # [Cout, HW]

    # BatchNorm, training-mode batch statistics (biased variance), one pass over y.
    inv_p = 1.0 / y.shape[1]                         # static at trace time
    sum_y = jnp.sum(y, axis=1, keepdims=True)        # [Cout, 1]
    sum_y2 = jnp.sum(y * y, axis=1, keepdims=True)   # [Cout, 1]
    mean = sum_y * inv_p
    var = sum_y2 * inv_p - mean * mean

    # gamma/beta arrive fused as a single (Cout, 2) tile; static lane slices are free.
    gamma = gb_ref[:, 0:1]                           # [Cout, 1]
    beta = gb_ref[:, 1:2]                            # [Cout, 1]

    # Fold gamma/beta into scale/shift, then fused normalize + residual add.
    scale = gamma * jax.lax.rsqrt(var + EPS)         # [Cout, 1]  (rsqrt -> EUP slot)
    shift = beta - mean * scale                      # [Cout, 1]
    o_ref[...] = y * scale + (shift + res_ref[...])


def _conv_bn_add_impl(x_nchw, w_oihw, gamma, beta, res_nchw):
    N, Cin, H, W = x_nchw.shape
    Cout = w_oihw.shape[0]
    HW = H * W
    # N == 1: all of these reshapes are free (contiguous, no data movement).
    x2d = x_nchw.reshape(Cin, HW)
    res2d = res_nchw.reshape(Cout, HW)
    w2d = w_oihw.reshape(Cout, Cin)
    gb2d = jnp.stack([gamma, beta], axis=1)          # (Cout, 2): one tiny DMA

    flops = 2 * Cout * Cin * HW
    bytes_accessed = 4 * (Cout * Cin + Cin * HW + Cout * 2 + 2 * Cout * HW)

    out2d = pl.pallas_call(
        conv_bn_add_kernel,
        out_shape=jax.ShapeDtypeStruct((Cout, HW), jnp.float32),
        in_specs=[
            pl.BlockSpec((Cout, Cin), lambda: (0, 0)),   # weight
            pl.BlockSpec((Cin, HW), lambda: (0, 0)),     # activations
            pl.BlockSpec((Cout, 2), lambda: (0, 0)),     # fused gamma/beta
            pl.BlockSpec((Cout, HW), lambda: (0, 0)),    # residual
        ],
        out_specs=pl.BlockSpec((Cout, HW), lambda: (0, 0)),
        cost_estimate=pl.CostEstimate(
            flops=flops, transcendentals=Cout, bytes_accessed=bytes_accessed),
        # NOTE: input_output_aliases={3: 0} when the caller donates the residual.
    )(w2d, x2d, gb2d, res2d)

    return out2d.reshape(N, Cout, H, W)  # free reshape back to NCHW


conv_bn_add = jax.jit(_conv_bn_add_impl)


def reference(x_nchw, w_oihw, gamma, beta, res_nchw):
    """Pure-JAX reference of the same semantics (two-pass variance)."""
    N, Cin, H, W = x_nchw.shape
    Cout = w_oihw.shape[0]
    x2d = jnp.transpose(x_nchw, (0, 2, 3, 1)).reshape(-1, Cin)
    y = x2d @ w_oihw.reshape(Cout, Cin).T
    mean = y.mean(axis=0, keepdims=True)
    var = ((y - mean) ** 2).mean(axis=0, keepdims=True)
    y = (y - mean) / jnp.sqrt(var + EPS) * gamma[None, :] + beta[None, :]
    y = y.reshape(N, H, W, Cout).transpose(0, 3, 1, 2)
    return y + res_nchw


if __name__ == "__main__":
    # Shapes implied by the module: x156 (1, 336, 14, 14), x149 (1, 112, 14, 14).
    N, Cin, Cout, H, W = 1, 336, 112, 14, 14

    key = jax.random.PRNGKey(0)
    k1, k2, k3 = jax.random.split(key, 3)

    x156 = jax.random.normal(k1, (N, Cin, H, W), dtype=jnp.float32)
    x149 = jax.random.normal(k2, (N, Cout, H, W), dtype=jnp.float32)

    # Deterministic parameter init (conv weight ~ small normal; BN gamma/beta non-trivial).
    w_oihw = 0.05 * jax.random.normal(k3, (Cout, Cin, 1, 1), dtype=jnp.float32)
    gamma = 1.0 + 0.01 * jnp.arange(Cout, dtype=jnp.float32)
    beta = 0.02 * jnp.arange(Cout, dtype=jnp.float32)

    # TODO(synk): running_mean / running_var updates (BatchNorm training-mode side
    # effect) are not produced; the forward output only depends on batch statistics.

    out = conv_bn_add(x156, w_oihw, gamma, beta, x149)
    out = jax.block_until_ready(out)

    ref = reference(x156, w_oihw, gamma, beta, x149)
    assert out.shape == (N, Cout, H, W), out.shape
    assert jnp.allclose(out, ref, atol=1e-3, rtol=1e-3), float(jnp.max(jnp.abs(out - ref)))

    print("KERNEL_OK")
</pallas_src>

<mosaic_0001>
module attributes {stable_mosaic.version = 11 : i64} {
  func.func @conv_bn_add_kernel(%arg0: memref<112x336xf32, #tpu.memory_space<vmem>>, %arg1: memref<336x196xf32, #tpu.memory_space<vmem>>, %arg2: memref<112x2xf32, #tpu.memory_space<vmem>>, %arg3: memref<112x196xf32, #tpu.memory_space<vmem>>, %arg4: memref<112x196xf32, #tpu.memory_space<vmem>>) attributes {dimension_semantics = [], scalar_prefetch = 0 : i64, scratch_operands = 0 : i64, tpu.core_type = #tpu.core_type<tc>} {
    %c0 = arith.constant 0 : index
    %c0_0 = arith.constant 0 : index
    %0 = vector.load %arg0[%c0, %c0_0] : memref<112x336xf32, #tpu.memory_space<vmem>>, vector<112x336xf32>
    %c0_1 = arith.constant 0 : index
    %c0_2 = arith.constant 0 : index
    %1 = vector.load %arg1[%c0_1, %c0_2] : memref<336x196xf32, #tpu.memory_space<vmem>>, vector<336x196xf32>
    %cst = arith.constant dense<0.000000e+00> : vector<112x196xf32>
    %2 = tpu.matmul %0, %1, %cst {dimension_numbers = #tpu.dot_dimension_numbers<[1], [0], [0], [1], [0, 0, 1, 1], [], []>} : vector<112x336xf32>, vector<336x196xf32>, vector<112x196xf32> -> vector<112x196xf32>
    %cst_3 = arith.constant dense<0.000000e+00> : vector<112xf32>
    %3 = vector.multi_reduction <add>, %2, %cst_3 [1] : vector<112x196xf32> to vector<112xf32>
    %4 = vector.shape_cast %3 : vector<112xf32> to vector<112x1xf32>
    %5 = arith.mulf %2, %2 : vector<112x196xf32>
    %cst_4 = arith.constant dense<0.000000e+00> : vector<112xf32>
    %6 = vector.multi_reduction <add>, %5, %cst_4 [1] : vector<112x196xf32> to vector<112xf32>
    %7 = vector.shape_cast %6 : vector<112xf32> to vector<112x1xf32>
    %cst_5 = arith.constant 0.00510204071 : f32
    %8 = vector.broadcast %cst_5 : f32 to vector<112x1xf32>
    %9 = arith.mulf %4, %8 : vector<112x1xf32>
    %cst_6 = arith.constant 0.00510204071 : f32
    %10 = vector.broadcast %cst_6 : f32 to vector<112x1xf32>
    %11 = arith.mulf %7, %10 : vector<112x1xf32>
    %12 = arith.mulf %9, %9 : vector<112x1xf32>
    %13 = arith.subf %11, %12 : vector<112x1xf32>
    %c0_7 = arith.constant 0 : index
    %c0_8 = arith.constant 0 : index
    %14 = vector.load %arg2[%c0_7, %c0_8] : memref<112x2xf32, #tpu.memory_space<vmem>>, vector<112x1xf32>
    %c0_9 = arith.constant 0 : index
    %c1 = arith.constant 1 : index
    %15 = vector.load %arg2[%c0_9, %c1] : memref<112x2xf32, #tpu.memory_space<vmem>>, vector<112x1xf32>
    %cst_10 = arith.constant 1.000000e-03 : f32
    %16 = vector.broadcast %cst_10 : f32 to vector<112x1xf32>
    %17 = arith.addf %13, %16 : vector<112x1xf32>
    %18 = math.rsqrt %17 : vector<112x1xf32>
    %19 = arith.mulf %14, %18 : vector<112x1xf32>
    %20 = arith.mulf %9, %19 : vector<112x1xf32>
    %21 = arith.subf %15, %20 : vector<112x1xf32>
    %22 = vector.broadcast %19 : vector<112x1xf32> to vector<112x196xf32>
    %23 = arith.mulf %2, %22 : vector<112x196xf32>
    %c0_11 = arith.constant 0 : index
    %c0_12 = arith.constant 0 : index
    %24 = vector.load %arg3[%c0_11, %c0_12] : memref<112x196xf32, #tpu.memory_space<vmem>>, vector<112x196xf32>
    %25 = vector.broadcast %21 : vector<112x1xf32> to vector<112x196xf32>
    %26 = arith.addf %25, %24 : vector<112x196xf32>
    %27 = arith.addf %23, %26 : vector<112x196xf32>
    %c0_13 = arith.constant 0 : index
    %c0_14 = arith.constant 0 : index
    %28 = vector.load %arg4[%c0_13, %c0_14] : memref<112x196xf32, #tpu.memory_space<vmem>>, vector<112x196xf32>
    tpu.vector_store %arg4[%c0_13, %c0_14], %27 {strides = array<i32>} : memref<112x196xf32, #tpu.memory_space<vmem>>, vector<112x196xf32>,
    return
  }
}

</mosaic_0001>

<llo_original>
// kernel: _conv_bn_add_impl.1
$region0: #{_conv_bn_add_impl.1}
  #allocation0 [shape = 'u32[]', space=smem, size = 0x4, offset = 0x4, fixed_abs, tag = 'smem constant byte address 0x4 - core index']
  #allocation1 [shape = 'u32[144,128]{1,0:T(1,128)}', space=vmem, size = 0x12000, scoped, tag = 'internal scratch']
  %s0 = inlined_call_operand.vmem [shape: f32[112,336], index: 0, kind: input, shape index: {}]
  %s1 = inlined_call_operand.vmem [shape: f32[336,196], index: 1, kind: input, shape index: {}]
  %s2 = inlined_call_operand.vmem [shape: f32[112,2], index: 2, kind: input, shape index: {}]
  %s3 = inlined_call_operand.vmem [shape: f32[112,196], index: 3, kind: input, shape index: {}]
  %s4 = inlined_call_operand.vmem [shape: f32[112,196], index: 4, kind: output, shape index: {}]
  %s5 = sld [smem:[#allocation0]]
  $region26: #{_conv_bn_add_impl.1} parent=0
    _
  %s7 = ssub.s32 1, %s5
  %s8 = scalar_select 0, %s7, %s5
  // Predicated region
  $region2: #{_conv_bn_add_impl.1} parent=0 // pred_check
    _
  $region3: #{_conv_bn_add_impl.1} parent=0 // pred_check_branch
    %10 = sbr.rel (0) target = $region5
  $region4: #{_conv_bn_add_impl.1} parent=0 // pred_region
    _
  $region5: #{_conv_bn_add_impl.1} parent=0 // pred_fallthru
    _
  // Predicated region
  $region6: #{_conv_bn_add_impl.1} parent=0 // pred_check
    _
  $region7: #{_conv_bn_add_impl.1} parent=0 // pred_check_branch
    %12 = sbr.rel (0) target = $region9
  $region8: #{_conv_bn_add_impl.1} parent=0 // pred_region
    _
  $region9: #{_conv_bn_add_impl.1} parent=0 // pred_fallthru
    _
  // Predicated region
  $region10: #{_conv_bn_add_impl.1} parent=0 // pred_check
    _
  $region11: #{_conv_bn_add_impl.1} parent=0 // pred_check_branch
    %14 = sbr.rel (0) target = $region13
  $region12: #{_conv_bn_add_impl.1} parent=0 // pred_region
    _
  $region13: #{_conv_bn_add_impl.1} parent=0 // pred_fallthru
    _
  // Predicated region
  $region14: #{_conv_bn_add_impl.1} parent=0 // pred_check
    _
  $region15: #{_conv_bn_add_impl.1} parent=0 // pred_check_branch
    %16 = sbr.rel (0) target = $region17
  $region16: #{_conv_bn_add_impl.1} parent=0 // pred_region
    _
  $region17: #{_conv_bn_add_impl.1} parent=0 // pred_fallthru
    _
  %v17 = vld [vmem:[%s0] sm:$0xff]
  %v18 = vld [vmem:[%s0 + $0x8] sm:$0xff]
  %v19 = vld [vmem:[%s0 + $0x10] sm:$0xff]
  %v20 = vld [vmem:[%s0 + $0x18] sm:$0xff]
  %v21 = vld [vmem:[%s0 + $0x20] sm:$0xff]
  %v22 = vld [vmem:[%s0 + $0x28] sm:$0xff]
  %v23 = vld [vmem:[%s0 + $0x30] sm:$0xff]
  %v24 = vld [vmem:[%s0 + $0x38] sm:$0xff]
  %v25 = vld [vmem:[%s0 + $0x40] sm:$0xff]
  %v26 = vld [vmem:[%s0 + $0x48] sm:$0xff]
  %v27 = vld [vmem:[%s0 + $0x50] sm:$0xff]
  %v28 = vld [vmem:[%s0 + $0x58] sm:$0xff]
  %v29 = vld [vmem:[%s0 + $0x60] sm:$0xff]
  %v30 = vld [vmem:[%s0 + $0x68] sm:$0xff]
  %v31 = vld [vmem:[%s0 + $0x70] sm:$0xff]
  %v32 = vld [vmem:[%s0 + $0x78] sm:$0xff]
  %v33 = vld [vmem:[%s0 + $0x80] sm:$0xff]
  %v34 = vld [vmem:[%s0 + $0x88] sm:$0xff]
  %v35 = vld [vmem:[%s0 + $0x90] sm:$0xff]
  %v36 = vld [vmem:[%s0 + $0x98] sm:$0xff]
  %v37 = vld [vmem:[%s0 + $0xa0] sm:$0xff]
  %v38 = vld [vmem:[%s0 + $0xa8] sm:$0xff]
  %v39 = vld [vmem:[%s0 + $0xb0] sm:$0xff]
  %v40 = vld [vmem:[%s0 + $0xb8] sm:$0xff]
  %v41 = vld [vmem:[%s0 + $0xc0] sm:$0xff]
  %v42 = vld [vmem:[%s0 + $0xc8] sm:$0xff]
  %v43 = vld [vmem:[%s0 + $0xd0] sm:$0xff]
  %v44 = vld [vmem:[%s0 + $0xd8] sm:$0xff]
  %v45 = vld [vmem:[%s0 + $0xe0] sm:$0xff]
  %v46 = vld [vmem:[%s0 + $0xe8] sm:$0xff]
  %v47 = vld [vmem:[%s0 + $0xf0] sm:$0xff]
  %v48 = vld [vmem:[%s0 + $0xf8] sm:$0xff]
  %v49 = vld [vmem:[%s0 + $0x100] sm:$0xff]
  %v50 = vld [vmem:[%s0 + $0x108] sm:$0xff]
  %v51 = vld [vmem:[%s0 + $0x110] sm:$0xff]
  %v52 = vld [vmem:[%s0 + $0x118] sm:$0xff]
  %v53 = vld [vmem:[%s0 + $0x120] sm:$0xff]
  %v54 = vld [vmem:[%s0 + $0x128] sm:$0xff]
  %v55 = vld [vmem:[%s0 + $0x130] sm:$0xff]
  %v56 = vld [vmem:[%s0 + $0x138] sm:$0xff]
  %v57 = vld [vmem:[%s0 + $0x140] sm:$0xff]
  %v58 = vld [vmem:[%s0 + $0x148] sm:$0xff]
  %v59 = vld [vmem:[%s1] sm:$0xff]
  %v60 = vld [vmem:[%s1 + $0x8] sm:$0xff]
  %v61 = vld [vmem:[%s1 + $0x10] sm:$0xff]
  %v62 = vld [vmem:[%s1 + $0x18] sm:$0xff]
  %v63 = vld [vmem:[%s1 + $0x20] sm:$0xff]
  %v64 = vld [vmem:[%s1 + $0x28] sm:$0xff]
  %v65 = vld [vmem:[%s1 + $0x30] sm:$0xff]
  %v66 = vld [vmem:[%s1 + $0x38] sm:$0xff]
  %v67 = vld [vmem:[%s1 + $0x40] sm:$0xff]
  %v68 = vld [vmem:[%s1 + $0x48] sm:$0xff]
  %v69 = vld [vmem:[%s1 + $0x50] sm:$0xff]
  %v70 = vld [vmem:[%s1 + $0x58] sm:$0xff]
  %v71 = vld [vmem:[%s1 + $0x60] sm:$0xff]
  %v72 = vld [vmem:[%s1 + $0x68] sm:$0xff]
  %v73 = vld [vmem:[%s1 + $0x70] sm:$0xff]
  %v74 = vld [vmem:[%s1 + $0x78] sm:$0xff]
  %v75 = vld [vmem:[%s1 + $0x80] sm:$0xff]
  %v76 = vld [vmem:[%s1 + $0x88] sm:$0xff]
  %v77 = vld [vmem:[%s1 + $0x90] sm:$0xff]
  %v78 = vld [vmem:[%s1 + $0x98] sm:$0xff]
  %v79 = vld [vmem:[%s1 + $0xa0] sm:$0xff]
  %v80 = vld [vmem:[%s1 + $0xa8] sm:$0xff]
  %v81 = vld [vmem:[%s1 + $0xb0] sm:$0xff]
  %v82 = vld [vmem:[%s1 + $0xb8] sm:$0xff]
  %v83 = vld [vmem:[%s1 + $0xc0] sm:$0xff]
  %v84 = vld [vmem:[%s1 + $0xc8] sm:$0xff]
  %v85 = vld [vmem:[%s1 + $0xd0] sm:$0xff]
  %v86 = vld [vmem:[%s1 + $0xd8] sm:$0xff]
  %v87 = vld [vmem:[%s1 + $0xe0] sm:$0xff]
  %v88 = vld [vmem:[%s1 + $0xe8] sm:$0xff]
  %v89 = vld [vmem:[%s1 + $0xf0] sm:$0xff]
  %v90 = vld [vmem:[%s1 + $0xf8] sm:$0xff]
  %v91 = vld [vmem:[%s1 + $0x100] sm:$0xff]
  %v92 = vld [vmem:[%s1 + $0x108] sm:$0xff]
  %v93 = vld [vmem:[%s1 + $0x110] sm:$0xff]
  %v94 = vld [vmem:[%s1 + $0x118] sm:$0xff]
  %v95 = vld [vmem:[%s1 + $0x120] sm:$0xff]
  %v96 = vld [vmem:[%s1 + $0x128] sm:$0xff]
  %v97 = vld [vmem:[%s1 + $0x130] sm:$0xff]
  %v98 = vld [vmem:[%s1 + $0x138] sm:$0xff]
  %v99 = vld [vmem:[%s1 + $0x140] sm:$0xff]
  %v100 = vld [vmem:[%s1 + $0x148] sm:$0xff]
  %v101 = vld [vmem:[%s1 + $0x150] sm:$0xff]
  %v102 = vld [vmem:[%s1 + $0x158] sm:$0xff]
  %v103 = vld [vmem:[%s1 + $0x160] sm:$0xff]
  %v104 = vld [vmem:[%s1 + $0x168] sm:$0xff]
  %v105 = vld [vmem:[%s1 + $0x170] sm:$0xff]
  %v106 = vld [vmem:[%s1 + $0x178] sm:$0xff]
  %v107 = vld [vmem:[%s1 + $0x180] sm:$0xff]
  %v108 = vld [vmem:[%s1 + $0x188] sm:$0xff]
  %v109 = vld [vmem:[%s1 + $0x190] sm:$0xff]
  %v110 = vld [vmem:[%s1 + $0x198] sm:$0xff]
  %v111 = vld [vmem:[%s1 + $0x1a0] sm:$0xff]
  %v112 = vld [vmem:[%s1 + $0x1a8] sm:$0xff]
  %v113 = vld [vmem:[%s1 + $0x1b0] sm:$0xff]
  %v114 = vld [vmem:[%s1 + $0x1b8] sm:$0xff]
  %v115 = vld [vmem:[%s1 + $0x1c0] sm:$0xff]
  %v116 = vld [vmem:[%s1 + $0x1c8] sm:$0xff]
  %v117 = vld [vmem:[%s1 + $0x1d0] sm:$0xff]
  %v118 = vld [vmem:[%s1 + $0x1d8] sm:$0xff]
  %v119 = vld [vmem:[%s1 + $0x1e0] sm:$0xff]
  %v120 = vld [vmem:[%s1 + $0x1e8] sm:$0xff]
  %v121 = vld [vmem:[%s1 + $0x1f0] sm:$0xff]
  %v122 = vld [vmem:[%s1 + $0x1f8] sm:$0xff]
  %v123 = vld [vmem:[%s1 + $0x200] sm:$0xff]
  %v124 = vld [vmem:[%s1 + $0x208] sm:$0xff]
  %v125 = vld [vmem:[%s1 + $0x210] sm:$0xff]
  %v126 = vld [vmem:[%s1 + $0x218] sm:$0xff]
  %v127 = vld [vmem:[%s1 + $0x220] sm:$0xff]
  %v128 = vld [vmem:[%s1 + $0x228] sm:$0xff]
  %v129 = vld [vmem:[%s1 + $0x230] sm:$0xff]
  %v130 = vld [vmem:[%s1 + $0x238] sm:$0xff]
  %v131 = vld [vmem:[%s1 + $0x240] sm:$0xff]
  %v132 = vld [vmem:[%s1 + $0x248] sm:$0xff]
  %v133 = vld [vmem:[%s1 + $0x250] sm:$0xff]
  %v134 = vld [vmem:[%s1 + $0x258] sm:$0xff]
  %v135 = vld [vmem:[%s1 + $0x260] sm:$0xff]
  %v136 = vld [vmem:[%s1 + $0x268] sm:$0xff]
  %v137 = vld [vmem:[%s1 + $0x270] sm:$0xff]
  %v138 = vld [vmem:[%s1 + $0x278] sm:$0xff]
  %v139 = vld [vmem:[%s1 + $0x280] sm:$0xff]
  %v140 = vld [vmem:[%s1 + $0x288] sm:$0xff]
  %v141 = vld [vmem:[%s1 + $0x290] sm:$0xff]
  %v142 = vld [vmem:[%s1 + $0x298] sm:$0xff]
  %vm143 = vcmask 654336
  %v145 = vsel %vm143, %v19, 0
  %v148 = vsel %vm143, %v22, 0
  %v151 = vsel %vm143, %v25, 0
  %v154 = vsel %vm143, %v28, 0
  %v157 = vsel %vm143, %v31, 0
  %v160 = vsel %vm143, %v34, 0
  %v163 = vsel %vm143, %v37, 0
  %v166 = vsel %vm143, %v40, 0
  %v169 = vsel %vm143, %v43, 0
  %v172 = vsel %vm143, %v46, 0
  %v175 = vsel %vm143, %v49, 0
  %v178 = vsel %vm143, %v52, 0
  %v181 = vsel %vm143, %v55, 0
  %v184 = vsel %vm143, %v58, 0
  %186 = vmatprep.subr.mxu0 %v90
  %187 = vmatpush1.msra.mxu0 %v89
  %188 = vmatprep.subr.mxu0 %v88
  %189 = vmatpush1.msra.mxu0 %v87
  %190 = vmatprep.subr.mxu0 %v86
  %191 = vmatpush1.msra.mxu0 %v85
  %192 = vmatprep.subr.mxu0 %v84
  %193 = vmatpush1.msra.mxu0 %v83
  %194 = vmatprep.subr.mxu0 %v82
  %195 = vmatpush1.msra.mxu0 %v81
  %196 = vmatprep.subr.mxu0 %v80
  %197 = vmatpush1.msra.mxu0 %v79
  %198 = vmatprep.subr.mxu0 %v78
  %199 = vmatpush1.msra.mxu0 %v77
  %200 = vmatprep.subr.mxu0 %v76
  %201 = vmatpush1.msra.mxu0 %v75
  %202 = vmatprep.subr.mxu0 %v74
  %203 = vmatpush1.msra.mxu0 %v73
  %204 = vmatprep.subr.mxu0 %v72
  %205 = vmatpush1.msra.mxu0 %v71
  %206 = vmatprep.subr.mxu0 %v70
  %207 = vmatpush1.msra.mxu0 %v69
  %208 = vmatprep.subr.mxu0 %v68
  %209 = vmatpush1.msra.mxu0 %v67
  %210 = vmatprep.subr.mxu0 %v66
  %211 = vmatpush1.msra.mxu0 %v65
  %212 = vmatprep.subr.mxu0 %v64
  %213 = vmatpush1.msra.mxu0 %v63
  %214 = vmatprep.subr.mxu0 %v62
  %215 = vmatpush1.msra.mxu0 %v61
  %216 = vmatprep.subr.mxu0 %v60
  %217 = vmatpush1.msra.mxu0 %v59
  %218 = vmatprep.subr.mxu0 %v122
  %219 = vmatpush2.msra.mxu0 %v121
  %220 = vmatprep.subr.mxu0 %v120
  %221 = vmatpush2.msra.mxu0 %v119
  %222 = vmatprep.subr.mxu0 %v118
  %223 = vmatpush2.msra.mxu0 %v117
  %224 = vmatprep.subr.mxu0 %v116
  %225 = vmatpush2.msra.mxu0 %v115
  %226 = vmatprep.subr.mxu0 %v114
  %227 = vmatpush2.msra.mxu0 %v113
  %228 = vmatprep.subr.mxu0 %v112
  %229 = vmatpush2.msra.mxu0 %v111
  %230 = vmatprep.subr.mxu0 %v110
  %231 = vmatpush2.msra.mxu0 %v109
  %232 = vmatprep.subr.mxu0 %v108
  %233 = vmatpush2.msra.mxu0 %v107
  %234 = vmatprep.subr.mxu0 %v106
  %235 = vmatpush2.msra.mxu0 %v105
  %236 = vmatprep.subr.mxu0 %v104
  %237 = vmatpush2.msra.mxu0 %v103
  %238 = vmatprep.subr.mxu0 %v102
  %239 = vmatpush2.msra.mxu0 %v101
  %240 = vmatprep.subr.mxu0 %v100
  %241 = vmatpush2.msra.mxu0 %v99
  %242 = vmatprep.subr.mxu0 %v98
  %243 = vmatpush2.msra.mxu0 %v97
  %244 = vmatprep.subr.mxu0 %v96
  %245 = vmatpush2.msra.mxu0 %v95
  %246 = vmatprep.subr.mxu0 %v94
  %247 = vmatpush2.msra.mxu0 %v93
  %248 = vmatprep.subr.mxu0 %v92
  %249 = vmatpush2.msra.mxu0 %v91
  %250 = vmatprep.mubr.f32.mxu0 %v18
  %251 = vmatmul.mubr.f32.gmra.mxu0 %v17
  %v252 = vpop.f32.mrf.mxu0
  %v253 = vadd.f32 0.0, %v252
  %v254 = vpop.f32.mrf.mxu0
  %v255 = vadd.f32 0.0, %v254
  %256 = vmatprep.mubr.f32.mxu0 %v21
  %257 = vmatmul.mubr.f32.gmra.mxu0 %v20
  %v258 = vpop.f32.mrf.mxu0
  %v259 = vadd.f32 0.0, %v258
  %v260 = vpop.f32.mrf.mxu0
  %v261 = vadd.f32 0.0, %v260
  %262 = vmatprep.mubr.f32.mxu0 %v24
  %263 = vmatmul.mubr.f32.gmra.mxu0 %v23
  %v264 = vpop.f32.mrf.mxu0
  %v265 = vadd.f32 0.0, %v264
  %v266 = vpop.f32.mrf.mxu0
  %v267 = vadd.f32 0.0, %v266
  %268 = vmatprep.mubr.f32.mxu0 %v27
  %269 = vmatmul.mubr.f32.gmra.mxu0 %v26
  %v270 = vpop.f32.mrf.mxu0
  %v271 = vadd.f32 0.0, %v270
  %v272 = vpop.f32.mrf.mxu0
  %v273 = vadd.f32 0.0, %v272
  %274 = vmatprep.mubr.f32.mxu0 %v30
  %275 = vmatmul.mubr.f32.gmra.mxu0 %v29
  %v276 = vpop.f32.mrf.mxu0
  %v277 = vadd.f32 0.0, %v276
  %v278 = vpop.f32.mrf.mxu0
  %v279 = vadd.f32 0.0, %v278
  %280 = vmatprep.mubr.f32.mxu0 %v33
  %281 = vmatmul.mubr.f32.gmra.mxu0 %v32
  %v282 = vpop.f32.mrf.mxu0
  %v283 = vadd.f32 0.0, %v282
  %v284 = vpop.f32.mrf.mxu0
  %v285 = vadd.f32 0.0, %v284
  %286 = vmatprep.mubr.f32.mxu0 %v36
  %287 = vmatmul.mubr.f32.gmra.mxu0 %v35
  %v288 = vpop.f32.mrf.mxu0
  %v289 = vadd.f32 0.0, %v288
  %v290 = vpop.f32.mrf.mxu0
  %v291 = vadd.f32 0.0, %v290
  %292 = vmatprep.mubr.f32.mxu0 %v39
  %293 = vmatmul.mubr.f32.gmra.mxu0 %v38
  %v294 = vpop.f32.mrf.mxu0
  %v295 = vadd.f32 0.0, %v294
  %v296 = vpop.f32.mrf.mxu0
  %v297 = vadd.f32 0.0, %v296
  %298 = vmatprep.mubr.f32.mxu0 %v42
  %299 = vmatmul.mubr.f32.gmra.mxu0 %v41
  %v300 = vpop.f32.mrf.mxu0
  %v301 = vadd.f32 0.0, %v300
  %v302 = vpop.f32.mrf.mxu0
  %v303 = vadd.f32 0.0, %v302
  %304 = vmatprep.mubr.f32.mxu0 %v45
  %305 = vmatmul.mubr.f32.gmra.mxu0 %v44
  %v306 = vpop.f32.mrf.mxu0
  %v307 = vadd.f32 0.0, %v306
  %v308 = vpop.f32.mrf.mxu0
  %v309 = vadd.f32 0.0, %v308
  %310 = vmatprep.mubr.f32.mxu0 %v48
  %311 = vmatmul.mubr.f32.gmra.mxu0 %v47
  %v312 = vpop.f32.mrf.mxu0
  %v313 = vadd.f32 0.0, %v312
  %v314 = vpop.f32.mrf.mxu0
  %v315 = vadd.f32 0.0, %v314
  %316 = vmatprep.mubr.f32.mxu0 %v51
  %317 = vmatmul.mubr.f32.gmra.mxu0 %v50
  %v318 = vpop.f32.mrf.mxu0
  %v319 = vadd.f32 0.0, %v318
  %v320 = vpop.f32.mrf.mxu0
  %v321 = vadd.f32 0.0, %v320
  %322 = vmatprep.mubr.f32.mxu0 %v54
  %323 = vmatmul.mubr.f32.gmra.mxu0 %v53
  %v324 = vpop.f32.mrf.mxu0
  %v325 = vadd.f32 0.0, %v324
  %v326 = vpop.f32.mrf.mxu0
  %v327 = vadd.f32 0.0, %v326
  %328 = vmatprep.mubr.f32.mxu0 %v57
  %329 = vmatmul.mubr.f32.gmra.mxu0 %v56
  %v330 = vpop.f32.mrf.mxu0
  %v331 = vadd.f32 0.0, %v330
  %v332 = vpop.f32.mrf.mxu0
  %v333 = vadd.f32 0.0, %v332
  %334 = vdwg.mxu0
  %335 = vmatprep.subr.mxu0 0.0
  %336 = vmatpush1.msra.mxu0 0.0
  %337 = vmatprep.subr.mxu0 0.0
  %338 = vmatpush1.msra.mxu0 0.0
  %339 = vmatprep.subr.mxu0 0.0
  %340 = vmatpush1.msra.mxu0 0.0
  %341 = vmatprep.subr.mxu0 0.0
  %342 = vmatpush1.msra.mxu0 0.0
  %343 = vmatprep.subr.mxu0 0.0
  %344 = vmatpush1.msra.mxu0 0.0
  %345 = vmatprep.subr.mxu0 0.0
  %346 = vmatpush1.msra.mxu0 0.0
  %347 = vmatprep.subr.mxu0 %v142
  %348 = vmatpush1.msra.mxu0 %v141
  %349 = vmatprep.subr.mxu0 %v140
  %350 = vmatpush1.msra.mxu0 %v139
  %351 = vmatprep.subr.mxu0 %v138
  %352 = vmatpush1.msra.mxu0 %v137
  %353 = vmatprep.subr.mxu0 %v136
  %354 = vmatpush1.msra.mxu0 %v135
  %355 = vmatprep.subr.mxu0 %v134
  %356 = vmatpush1.msra.mxu0 %v133
  %357 = vmatprep.subr.mxu0 %v132
  %358 = vmatpush1.msra.mxu0 %v131
  %359 = vmatprep.subr.mxu0 %v130
  %360 = vmatpush1.msra.mxu0 %v129
  %361 = vmatprep.subr.mxu0 %v128
  %362 = vmatpush1.msra.mxu0 %v127
  %363 = vmatprep.subr.mxu0 %v126
  %364 = vmatpush1.msra.mxu0 %v125
  %365 = vmatprep.subr.mxu0 %v124
  %366 = vmatpush1.msra.mxu0 %v123
  %367 = vmatprep.subr.mxu0 0.0
  %368 = vmatpush2.msra.mxu0 0.0
  %369 = vmatprep.subr.mxu0 0.0
  %370 = vmatpush2.msra.mxu0 0.0
  %371 = vmatprep.subr.mxu0 0.0
  %372 = vmatpush2.msra.mxu0 0.0
  %373 = vmatprep.subr.mxu0 0.0
  %374 = vmatpush2.msra.mxu0 0.0
  %375 = vmatprep.subr.mxu0 0.0
  %376 = vmatpush2.msra.mxu0 0.0
  %377 = vmatprep.subr.mxu0 0.0
  %378 = vmatpush2.msra.mxu0 0.0
  %379 = vmatprep.subr.mxu0 0.0
  %380 = vmatpush2.msra.mxu0 0.0
  %381 = vmatprep.subr.mxu0 0.0
  %382 = vmatpush2.msra.mxu0 0.0
  %383 = vmatprep.subr.mxu0 0.0
  %384 = vmatpush2.msra.mxu0 0.0
  %385 = vmatprep.subr.mxu0 0.0
  %386 = vmatpush2.msra.mxu0 0.0
  %387 = vmatprep.subr.mxu0 0.0
  %388 = vmatpush2.msra.mxu0 0.0
  %389 = vmatprep.subr.mxu0 0.0
  %390 = vmatpush2.msra.mxu0 0.0
  %391 = vmatprep.subr.mxu0 0.0
  %392 = vmatpush2.msra.mxu0 0.0
  %393 = vmatprep.subr.mxu0 0.0
  %394 = vmatpush2.msra.mxu0 0.0
  %395 = vmatprep.subr.mxu0 0.0
  %396 = vmatpush2.msra.mxu0 0.0
  %397 = vmatprep.subr.mxu0 0.0
  %398 = vmatpush2.msra.mxu0 0.0
  %399 = vmatprep.mubr.f32.mxu0 0.0
  %400 = vmatmul.mubr.f32.gmra.mxu0 %v145
  %v401 = vpop.f32.mrf.mxu0
  %v402 = vadd.f32 %v253, %v401
  %v403 = vpop.f32.mrf.mxu0
  %v404 = vadd.f32 %v255, %v403
  %405 = vmatprep.mubr.f32.mxu0 0.0
  %406 = vmatmul.mubr.f32.gmra.mxu0 %v148
  %v407 = vpop.f32.mrf.mxu0
  %v408 = vadd.f32 %v259, %v407
  %v409 = vpop.f32.mrf.mxu0
  %v410 = vadd.f32 %v261, %v409
  %411 = vmatprep.mubr.f32.mxu0 0.0
  %412 = vmatmul.mubr.f32.gmra.mxu0 %v151
  %v413 = vpop.f32.mrf.mxu0
  %v414 = vadd.f32 %v265, %v413
  %v415 = vpop.f32.mrf.mxu0
  %v416 = vadd.f32 %v267, %v415
  %417 = vmatprep.mubr.f32.mxu0 0.0
  %418 = vmatmul.mubr.f32.gmra.mxu0 %v154
  %v419 = vpop.f32.mrf.mxu0
  %v420 = vadd.f32 %v271, %v419
  %v421 = vpop.f32.mrf.mxu0
  %v422 = vadd.f32 %v273, %v421
  %423 = vmatprep.mubr.f32.mxu0 0.0
  %424 = vmatmul.mubr.f32.gmra.mxu0 %v157
  %v425 = vpop.f32.mrf.mxu0
  %v426 = vadd.f32 %v277, %v425
  %v427 = vpop.f32.mrf.mxu0
  %v428 = vadd.f32 %v279, %v427
  %429 = vmatprep.mubr.f32.mxu0 0.0
  %430 = vmatmul.mubr.f32.gmra.mxu0 %v160
  %v431 = vpop.f32.mrf.mxu0
  %v432 = vadd.f32 %v283, %v431
  %v433 = vpop.f32.mrf.mxu0
  %v434 = vadd.f32 %v285, %v433
  %435 = vmatprep.mubr.f32.mxu0 0.0
  %436 = vmatmul.mubr.f32.gmra.mxu0 %v163
  %v437 = vpop.f32.mrf.mxu0
  %v438 = vadd.f32 %v289, %v437
  %v439 = vpop.f32.mrf.mxu0
  %v440 = vadd.f32 %v291, %v439
  %441 = vmatprep.mubr.f32.mxu0 0.0
  %442 = vmatmul.mubr.f32.gmra.mxu0 %v166
  %v443 = vpop.f32.mrf.mxu0
  %v444 = vadd.f32 %v295, %v443
  %v445 = vpop.f32.mrf.mxu0
  %v446 = vadd.f32 %v297, %v445
  %447 = vmatprep.mubr.f32.mxu0 0.0
  %448 = vmatmul.mubr.f32.gmra.mxu0 %v169
  %v449 = vpop.f32.mrf.mxu0
  %v450 = vadd.f32 %v301, %v449
  %v451 = vpop.f32.mrf.mxu0
  %v452 = vadd.f32 %v303, %v451
  %453 = vmatprep.mubr.f32.mxu0 0.0
  %454 = vmatmul.mubr.f32.gmra.mxu0 %v172
  %v455 = vpop.f32.mrf.mxu0
  %v456 = vadd.f32 %v307, %v455
  %v457 = vpop.f32.mrf.mxu0
  %v458 = vadd.f32 %v309, %v457
  %459 = vmatprep.mubr.f32.mxu0 0.0
  %460 = vmatmul.mubr.f32.gmra.mxu0 %v175
  %v461 = vpop.f32.mrf.mxu0
  %v462 = vadd.f32 %v313, %v461
  %v463 = vpop.f32.mrf.mxu0
  %v464 = vadd.f32 %v315, %v463
  %465 = vmatprep.mubr.f32.mxu0 0.0
  %466 = vmatmul.mubr.f32.gmra.mxu0 %v178
  %v467 = vpop.f32.mrf.mxu0
  %v468 = vadd.f32 %v319, %v467
  %v469 = vpop.f32.mrf.mxu0
  %v470 = vadd.f32 %v321, %v469
  %471 = vmatprep.mubr.f32.mxu0 0.0
  %472 = vmatmul.mubr.f32.gmra.mxu0 %v181
  %v473 = vpop.f32.mrf.mxu0
  %v474 = vadd.f32 %v325, %v473
  %v475 = vpop.f32.mrf.mxu0
  %v476 = vadd.f32 %v327, %v475
  %477 = vmatprep.mubr.f32.mxu0 0.0
  %478 = vmatmul.mubr.f32.gmra.mxu0 %v184
  %v479 = vpop.f32.mrf.mxu0
  %v480 = vadd.f32 %v331, %v479
  %v481 = vpop.f32.mrf.mxu0
  %v482 = vadd.f32 %v333, %v481
  %483 = vdwg.mxu0
  %vm484 = vcmask 556032
  %v485 = vsel %vm484, %v404, 0.0
  %v486 = vadd.f32 %v402, %v485
  %487 = vadd.xlane.f32.xlu0 %v486
  %v488 = vpop.xlane.xlu0 %487
  %v489 = vsel %vm484, %v410, 0.0
  %v490 = vadd.f32 %v408, %v489
  %491 = vadd.xlane.f32.xlu0 %v490
  %v492 = vpop.xlane.xlu0 %491
  %v493 = vsel %vm484, %v416, 0.0
  %v494 = vadd.f32 %v414, %v493
  %495 = vadd.xlane.f32.xlu0 %v494
  %v496 = vpop.xlane.xlu0 %495
  %v497 = vsel %vm484, %v422, 0.0
  %v498 = vadd.f32 %v420, %v497
  %499 = vadd.xlane.f32.xlu0 %v498
  %v500 = vpop.xlane.xlu0 %499
  %v501 = vsel %vm484, %v428, 0.0
  %v502 = vadd.f32 %v426, %v501
  %503 = vadd.xlane.f32.xlu0 %v502
  %v504 = vpop.xlane.xlu0 %503
  %v505 = vsel %vm484, %v434, 0.0
  %v506 = vadd.f32 %v432, %v505
  %507 = vadd.xlane.f32.xlu0 %v506
  %v508 = vpop.xlane.xlu0 %507
  %v509 = vsel %vm484, %v440, 0.0
  %v510 = vadd.f32 %v438, %v509
  %511 = vadd.xlane.f32.xlu0 %v510
  %v512 = vpop.xlane.xlu0 %511
  %v513 = vsel %vm484, %v446, 0.0
  %v514 = vadd.f32 %v444, %v513
  %515 = vadd.xlane.f32.xlu0 %v514
  %v516 = vpop.xlane.xlu0 %515
  %v517 = vsel %vm484, %v452, 0.0
  %v518 = vadd.f32 %v450, %v517
  %519 = vadd.xlane.f32.xlu0 %v518
  %v520 = vpop.xlane.xlu0 %519
  %v521 = vsel %vm484, %v458, 0.0
  %v522 = vadd.f32 %v456, %v521
  %523 = vadd.xlane.f32.xlu0 %v522
  %v524 = vpop.xlane.xlu0 %523
  %v525 = vsel %vm484, %v464, 0.0
  %v526 = vadd.f32 %v462, %v525
  %527 = vadd.xlane.f32.xlu0 %v526
  %v528 = vpop.xlane.xlu0 %527
  %v529 = vsel %vm484, %v470, 0.0
  %v530 = vadd.f32 %v468, %v529
  %531 = vadd.xlane.f32.xlu0 %v530
  %v532 = vpop.xlane.xlu0 %531
  %v533 = vsel %vm484, %v476, 0.0
  %v534 = vadd.f32 %v474, %v533
  %535 = vadd.xlane.f32.xlu0 %v534
  %v536 = vpop.xlane.xlu0 %535
  %v537 = vsel %vm484, %v482, 0.0
  %v538 = vadd.f32 %v480, %v537
  %539 = vadd.xlane.f32.xlu0 %v538
  %v540 = vpop.xlane.xlu0 %539
  %v541 = vmul.f32 %v402, %v402
  %v542 = vmul.f32 %v404, %v404
  %v543 = vmul.f32 %v408, %v408
  %v544 = vmul.f32 %v410, %v410
  %v545 = vmul.f32 %v414, %v414
  %v546 = vmul.f32 %v416, %v416
  %v547 = vmul.f32 %v420, %v420
  %v548 = vmul.f32 %v422, %v422
  %v549 = vmul.f32 %v426, %v426
  %v550 = vmul.f32 %v428, %v428
  %v551 = vmul.f32 %v432, %v432
  %v552 = vmul.f32 %v434, %v434
  %v553 = vmul.f32 %v438, %v438
  %v554 = vmul.f32 %v440, %v440
  %v555 = vmul.f32 %v444, %v444
  %v556 = vmul.f32 %v446, %v446
  %v557 = vmul.f32 %v450, %v450
  %v558 = vmul.f32 %v452, %v452
  %v559 = vmul.f32 %v456, %v456
  %v560 = vmul.f32 %v458, %v458
  %v561 = vmul.f32 %v462, %v462
  %v562 = vmul.f32 %v464, %v464
  %v563 = vmul.f32 %v468, %v468
  %v564 = vmul.f32 %v470, %v470
  %v565 = vmul.f32 %v474, %v474
  %v566 = vmul.f32 %v476, %v476
  %v567 = vmul.f32 %v480, %v480
  %v568 = vmul.f32 %v482, %v482
  %v569 = vsel %vm484, %v542, 0.0
  %v570 = vadd.f32 %v541, %v569
  %571 = vadd.xlane.f32.xlu0 %v570
  %v572 = vpop.xlane.xlu0 %571
  %v573 = vsel %vm484, %v544, 0.0
  %v574 = vadd.f32 %v543, %v573
  %575 = vadd.xlane.f32.xlu0 %v574
  %v576 = vpop.xlane.xlu0 %575
  %v577 = vsel %vm484, %v546, 0.0
  %v578 = vadd.f32 %v545, %v577
  %579 = vadd.xlane.f32.xlu0 %v578
  %v580 = vpop.xlane.xlu0 %579
  %v581 = vsel %vm484, %v548, 0.0
  %v582 = vadd.f32 %v547, %v581
  %583 = vadd.xlane.f32.xlu0 %v582
  %v584 = vpop.xlane.xlu0 %583
  %v585 = vsel %vm484, %v550, 0.0
  %v586 = vadd.f32 %v549, %v585
  %587 = vadd.xlane.f32.xlu0 %v586
  %v588 = vpop.xlane.xlu0 %587
  %v589 = vsel %vm484, %v552, 0.0
  %v590 = vadd.f32 %v551, %v589
  %591 = vadd.xlane.f32.xlu0 %v590
  %v592 = vpop.xlane.xlu0 %591
  %v593 = vsel %vm484, %v554, 0.0
  %v594 = vadd.f32 %v553, %v593
  %595 = vadd.xlane.f32.xlu0 %v594
  %v596 = vpop.xlane.xlu0 %595
  %v597 = vsel %vm484, %v556, 0.0
  %v598 = vadd.f32 %v555, %v597
  %599 = vadd.xlane.f32.xlu0 %v598
  %v600 = vpop.xlane.xlu0 %599
  %v601 = vsel %vm484, %v558, 0.0
  %v602 = vadd.f32 %v557, %v601
  %603 = vadd.xlane.f32.xlu0 %v602
  %v604 = vpop.xlane.xlu0 %603
  %v605 = vsel %vm484, %v560, 0.0
  %v606 = vadd.f32 %v559, %v605
  %607 = vadd.xlane.f32.xlu0 %v606
  %v608 = vpop.xlane.xlu0 %607
  %v609 = vsel %vm484, %v562, 0.0
  %v610 = vadd.f32 %v561, %v609
  %611 = vadd.xlane.f32.xlu0 %v610
  %v612 = vpop.xlane.xlu0 %611
  %v613 = vsel %vm484, %v564, 0.0
  %v614 = vadd.f32 %v563, %v613
  %615 = vadd.xlane.f32.xlu0 %v614
  %v616 = vpop.xlane.xlu0 %615
  %v617 = vsel %vm484, %v566, 0.0
  %v618 = vadd.f32 %v565, %v617
  %619 = vadd.xlane.f32.xlu0 %v618
  %v620 = vpop.xlane.xlu0 %619
  %v621 = vsel %vm484, %v568, 0.0
  %v622 = vadd.f32 %v567, %v621
  %623 = vadd.xlane.f32.xlu0 %v622
  %v624 = vpop.xlane.xlu0 %623
  %v625 = vmul.f32 %v488, 0.0051020407
  %v626 = vmul.f32 %v492, 0.0051020407
  %v627 = vmul.f32 %v496, 0.0051020407
  %v628 = vmul.f32 %v500, 0.0051020407
  %v629 = vmul.f32 %v504, 0.0051020407
  %v630 = vmul.f32 %v508, 0.0051020407
  %v631 = vmul.f32 %v512, 0.0051020407
  %v632 = vmul.f32 %v516, 0.0051020407
  %v633 = vmul.f32 %v520, 0.0051020407
  %v634 = vmul.f32 %v524, 0.0051020407
  %v635 = vmul.f32 %v528, 0.0051020407
  %v636 = vmul.f32 %v532, 0.0051020407
  %v637 = vmul.f32 %v536, 0.0051020407
  %v638 = vmul.f32 %v540, 0.0051020407
  %v639 = vmul.f32 %v572, 0.0051020407
  %v640 = vmul.f32 %v576, 0.0051020407
  %v641 = vmul.f32 %v580, 0.0051020407
  %v642 = vmul.f32 %v584, 0.0051020407
  %v643 = vmul.f32 %v588, 0.0051020407
  %v644 = vmul.f32 %v592, 0.0051020407
  %v645 = vmul.f32 %v596, 0.0051020407
  %v646 = vmul.f32 %v600, 0.0051020407
  %v647 = vmul.f32 %v604, 0.0051020407
  %v648 = vmul.f32 %v608, 0.0051020407
  %v649 = vmul.f32 %v612, 0.0051020407
  %v650 = vmul.f32 %v616, 0.0051020407
  %v651 = vmul.f32 %v620, 0.0051020407
  %v652 = vmul.f32 %v624, 0.0051020407
  %v653 = vmul.f32 %v625, %v625
  %v654 = vmul.f32 %v626, %v626
  %v655 = vmul.f32 %v627, %v627
  %v656 = vmul.f32 %v628, %v628
  %v657 = vmul.f32 %v629, %v629
  %v658 = vmul.f32 %v630, %v630
  %v659 = vmul.f32 %v631, %v631
  %v660 = vmul.f32 %v632, %v632
  %v661 = vmul.f32 %v633, %v633
  %v662 = vmul.f32 %v634, %v634
  %v663 = vmul.f32 %v635, %v635
  %v664 = vmul.f32 %v636, %v636
  %v665 = vmul.f32 %v637, %v637
  %v666 = vmul.f32 %v638, %v638
  %v667 = vsub.f32 %v639, %v653
  %v668 = vsub.f32 %v640, %v654
  %v669 = vsub.f32 %v641, %v655
  %v670 = vsub.f32 %v642, %v656
  %v671 = vsub.f32 %v643, %v657
  %v672 = vsub.f32 %v644, %v658
  %v673 = vsub.f32 %v645, %v659
  %v674 = vsub.f32 %v646, %v660
  %v675 = vsub.f32 %v647, %v661
  %v676 = vsub.f32 %v648, %v662
  %v677 = vsub.f32 %v649, %v663
  %v678 = vsub.f32 %v650, %v664
  %v679 = vsub.f32 %v651, %v665
  %v680 = vsub.f32 %v652, %v666
  %v681 = vld [vmem:[%s2] sm:$0xff]
  %v682 = vld [vmem:[%s2 + $0x8] sm:$0xff]
  %v683 = vld [vmem:[%s2 + $0x10] sm:$0xff]
  %v684 = vld [vmem:[%s2 + $0x18] sm:$0xff]
  %v685 = vld [vmem:[%s2 + $0x20] sm:$0xff]
  %v686 = vld [vmem:[%s2 + $0x28] sm:$0xff]
  %v687 = vld [vmem:[%s2 + $0x30] sm:$0xff]
  %v688 = vld [vmem:[%s2 + $0x38] sm:$0xff]
  %v689 = vld [vmem:[%s2 + $0x40] sm:$0xff]
  %v690 = vld [vmem:[%s2 + $0x48] sm:$0xff]
  %v691 = vld [vmem:[%s2 + $0x50] sm:$0xff]
  %v692 = vld [vmem:[%s2 + $0x58] sm:$0xff]
  %v693 = vld [vmem:[%s2 + $0x60] sm:$0xff]
  %v694 = vld [vmem:[%s2 + $0x68] sm:$0xff]
  %v695 = vadd.f32 %v667, 0.001
  %v696 = vadd.f32 %v668, 0.001
  %v697 = vadd.f32 %v669, 0.001
  %v698 = vadd.f32 %v670, 0.001
  %v699 = vadd.f32 %v671, 0.001
  %v700 = vadd.f32 %v672, 0.001
  %v701 = vadd.f32 %v673, 0.001
  %v702 = vadd.f32 %v674, 0.001
  %v703 = vadd.f32 %v675, 0.001
  %v704 = vadd.f32 %v676, 0.001
  %v705 = vadd.f32 %v677, 0.001
  %v706 = vadd.f32 %v678, 0.001
  %v707 = vadd.f32 %v679, 0.001
  %v708 = vadd.f32 %v680, 0.001
  %v709 = vrsqrt.pop %v695
  %v710 = vrsqrt.pop %v696
  %v711 = vrsqrt.pop %v697
  %v712 = vrsqrt.pop %v698
  %v713 = vrsqrt.pop %v699
  %v714 = vrsqrt.pop %v700
  %v715 = vrsqrt.pop %v701
  %v716 = vrsqrt.pop %v702
  %v717 = vrsqrt.pop %v703
  %v718 = vrsqrt.pop %v704
  %v719 = vrsqrt.pop %v705
  %v720 = vrsqrt.pop %v706
  %v721 = vrsqrt.pop %v707
  %v722 = vrsqrt.pop %v708
  %v723 = vmul.f32 %v681, %v709
  %v724 = vmul.f32 %v682, %v710
  %v725 = vmul.f32 %v683, %v711
  %v726 = vmul.f32 %v684, %v712
  %v727 = vmul.f32 %v685, %v713
  %v728 = vmul.f32 %v686, %v714
  %v729 = vmul.f32 %v687, %v715
  %v730 = vmul.f32 %v688, %v716
  %v731 = vmul.f32 %v689, %v717
  %v732 = vmul.f32 %v690, %v718
  %v733 = vmul.f32 %v691, %v719
  %v734 = vmul.f32 %v692, %v720
  %v735 = vmul.f32 %v693, %v721
  %v736 = vmul.f32 %v694, %v722
  %v737 = vmul.f32 %v625, %v723
  %v738 = vmul.f32 %v626, %v724
  %v739 = vmul.f32 %v627, %v725
  %v740 = vmul.f32 %v628, %v726
  %v741 = vmul.f32 %v629, %v727
  %v742 = vmul.f32 %v630, %v728
  %v743 = vmul.f32 %v631, %v729
  %v744 = vmul.f32 %v632, %v730
  %v745 = vmul.f32 %v633, %v731
  %v746 = vmul.f32 %v634, %v732
  %v747 = vmul.f32 %v635, %v733
  %v748 = vmul.f32 %v636, %v734
  %v749 = vmul.f32 %v637, %v735
  %v750 = vmul.f32 %v638, %v736
  %765 = vrot.lane.b32.xlu0 %v737, 1
  %v766 = vpop.permute.xlu0 %765
  %767 = vrot.lane.b32.xlu0 %v738, 1
  %v768 = vpop.permute.xlu0 %767
  %769 = vrot.lane.b32.xlu0 %v739, 1
  %v770 = vpop.permute.xlu0 %769
  %771 = vrot.lane.b32.xlu0 %v740, 1
  %v772 = vpop.permute.xlu0 %771
  %773 = vrot.lane.b32.xlu0 %v741, 1
  %v774 = vpop.permute.xlu0 %773
  %775 = vrot.lane.b32.xlu0 %v742, 1
  %v776 = vpop.permute.xlu0 %775
  %777 = vrot.lane.b32.xlu0 %v743, 1
  %v778 = vpop.permute.xlu0 %777
  %779 = vrot.lane.b32.xlu0 %v744, 1
  %v780 = vpop.permute.xlu0 %779
  %781 = vrot.lane.b32.xlu0 %v745, 1
  %v782 = vpop.permute.xlu0 %781
  %783 = vrot.lane.b32.xlu0 %v746, 1
  %v784 = vpop.permute.xlu0 %783
  %785 = vrot.lane.b32.xlu0 %v747, 1
  %v786 = vpop.permute.xlu0 %785
  %787 = vrot.lane.b32.xlu0 %v748, 1
  %v788 = vpop.permute.xlu0 %787
  %789 = vrot.lane.b32.xlu0 %v749, 1
  %v790 = vpop.permute.xlu0 %789
  %791 = vrot.lane.b32.xlu0 %v750, 1
  %v792 = vpop.permute.xlu0 %791
  %v807 = vsub.f32 %v681, %v766
  %v808 = vsub.f32 %v682, %v768
  %v809 = vsub.f32 %v683, %v770
  %v810 = vsub.f32 %v684, %v772
  %v811 = vsub.f32 %v685, %v774
  %v812 = vsub.f32 %v686, %v776
  %v813 = vsub.f32 %v687, %v778
  %v814 = vsub.f32 %v688, %v780
  %v815 = vsub.f32 %v689, %v782
  %v816 = vsub.f32 %v690, %v784
  %v817 = vsub.f32 %v691, %v786
  %v818 = vsub.f32 %v692, %v788
  %v819 = vsub.f32 %v693, %v790
  %v820 = vsub.f32 %v694, %v792
  %822 = vset.pattern.permute.xlu0 0
  %823 = vperm.xlu0 %822, %v723
  %v824 = vpop.permute.xlu0 %823
  %827 = vset.pattern.permute.xlu0 0
  %828 = vperm.xlu0 %827, %v724
  %v829 = vpop.permute.xlu0 %828
  %832 = vset.pattern.permute.xlu0 0
  %833 = vperm.xlu0 %832, %v725
  %v834 = vpop.permute.xlu0 %833
  %837 = vset.pattern.permute.xlu0 0
  %838 = vperm.xlu0 %837, %v726
  %v839 = vpop.permute.xlu0 %838
  %842 = vset.pattern.permute.xlu0 0
  %843 = vperm.xlu0 %842, %v727
  %v844 = vpop.permute.xlu0 %843
  %847 = vset.pattern.permute.xlu0 0
  %848 = vperm.xlu0 %847, %v728
  %v849 = vpop.permute.xlu0 %848
  %852 = vset.pattern.permute.xlu0 0
  %853 = vperm.xlu0 %852, %v729
  %v854 = vpop.permute.xlu0 %853
  %857 = vset.pattern.permute.xlu0 0
  %858 = vperm.xlu0 %857, %v730
  %v859 = vpop.permute.xlu0 %858
  %862 = vset.pattern.permute.xlu0 0
  %863 = vperm.xlu0 %862, %v731
  %v864 = vpop.permute.xlu0 %863
  %867 = vset.pattern.permute.xlu0 0
  %868 = vperm.xlu0 %867, %v732
  %v869 = vpop.permute.xlu0 %868
  %872 = vset.pattern.permute.xlu0 0
  %873 = vperm.xlu0 %872, %v733
  %v874 = vpop.permute.xlu0 %873
  %877 = vset.pattern.permute.xlu0 0
  %878 = vperm.xlu0 %877, %v734
  %v879 = vpop.permute.xlu0 %878
  %882 = vset.pattern.permute.xlu0 0
  %883 = vperm.xlu0 %882, %v735
  %v884 = vpop.permute.xlu0 %883
  %887 = vset.pattern.permute.xlu0 0
  %888 = vperm.xlu0 %887, %v736
  %v889 = vpop.permute.xlu0 %888
  %v891 = vmul.f32 %v402, %v824
  %v892 = vmul.f32 %v404, %v824
  %v893 = vmul.f32 %v408, %v829
  %v894 = vmul.f32 %v410, %v829
  %v895 = vmul.f32 %v414, %v834
  %v896 = vmul.f32 %v416, %v834
  %v897 = vmul.f32 %v420, %v839
  %v898 = vmul.f32 %v422, %v839
  %v899 = vmul.f32 %v426, %v844
  %v900 = vmul.f32 %v428, %v844
  %v901 = vmul.f32 %v432, %v849
  %v902 = vmul.f32 %v434, %v849
  %v903 = vmul.f32 %v438, %v854
  %v904 = vmul.f32 %v440, %v854
  %v905 = vmul.f32 %v444, %v859
  %v906 = vmul.f32 %v446, %v859
  %v907 = vmul.f32 %v450, %v864
  %v908 = vmul.f32 %v452, %v864
  %v909 = vmul.f32 %v456, %v869
  %v910 = vmul.f32 %v458, %v869
  %v911 = vmul.f32 %v462, %v874
  %v912 = vmul.f32 %v464, %v874
  %v913 = vmul.f32 %v468, %v879
  %v914 = vmul.f32 %v470, %v879
  %v915 = vmul.f32 %v474, %v884
  %v916 = vmul.f32 %v476, %v884
  %v917 = vmul.f32 %v480, %v889
  %v918 = vmul.f32 %v482, %v889
  %v919 = vld [vmem:[%s3] sm:$0xff]
  %v920 = vld [vmem:[%s3 + $0x8] sm:$0xff]
  %v921 = vld [vmem:[%s3 + $0x10] sm:$0xff]
  %v922 = vld [vmem:[%s3 + $0x18] sm:$0xff]
  %v923 = vld [vmem:[%s3 + $0x20] sm:$0xff]
  %v924 = vld [vmem:[%s3 + $0x28] sm:$0xff]
  %v925 = vld [vmem:[%s3 + $0x30] sm:$0xff]
  %v926 = vld [vmem:[%s3 + $0x38] sm:$0xff]
  %v927 = vld [vmem:[%s3 + $0x40] sm:$0xff]
  %v928 = vld [vmem:[%s3 + $0x48] sm:$0xff]
  %v929 = vld [vmem:[%s3 + $0x50] sm:$0xff]
  %v930 = vld [vmem:[%s3 + $0x58] sm:$0xff]
  %v931 = vld [vmem:[%s3 + $0x60] sm:$0xff]
  %v932 = vld [vmem:[%s3 + $0x68] sm:$0xff]
  %v933 = vld [vmem:[%s3 + $0x70] sm:$0xff]
  %v934 = vld [vmem:[%s3 + $0x78] sm:$0xff]
  %v935 = vld [vmem:[%s3 + $0x80] sm:$0xff]
  %v936 = vld [vmem:[%s3 + $0x88] sm:$0xff]
  %v937 = vld [vmem:[%s3 + $0x90] sm:$0xff]
  %v938 = vld [vmem:[%s3 + $0x98] sm:$0xff]
  %v939 = vld [vmem:[%s3 + $0xa0] sm:$0xff]
  %v940 = vld [vmem:[%s3 + $0xa8] sm:$0xff]
  %v941 = vld [vmem:[%s3 + $0xb0] sm:$0xff]
  %v942 = vld [vmem:[%s3 + $0xb8] sm:$0xff]
  %v943 = vld [vmem:[%s3 + $0xc0] sm:$0xff]
  %v944 = vld [vmem:[%s3 + $0xc8] sm:$0xff]
  %v945 = vld [vmem:[%s3 + $0xd0] sm:$0xff]
  %v946 = vld [vmem:[%s3 + $0xd8] sm:$0xff]
  %948 = vset.pattern.permute.xlu0 1
  %949 = vperm.xlu0 %948, %v807
  %v950 = vpop.permute.xlu0 %949
  %953 = vset.pattern.permute.xlu0 1
  %954 = vperm.xlu0 %953, %v808
  %v955 = vpop.permute.xlu0 %954
  %958 = vset.pattern.permute.xlu0 1
  %959 = vperm.xlu0 %958, %v809
  %v960 = vpop.permute.xlu0 %959
  %963 = vset.pattern.permute.xlu0 1
  %964 = vperm.xlu0 %963, %v810
  %v965 = vpop.permute.xlu0 %964
  %968 = vset.pattern.permute.xlu0 1
  %969 = vperm.xlu0 %968, %v811
  %v970 = vpop.permute.xlu0 %969
  %973 = vset.pattern.permute.xlu0 1
  %974 = vperm.xlu0 %973, %v812
  %v975 = vpop.permute.xlu0 %974
  %978 = vset.pattern.permute.xlu0 1
  %979 = vperm.xlu0 %978, %v813
  %v980 = vpop.permute.xlu0 %979
  %983 = vset.pattern.permute.xlu0 1
  %984 = vperm.xlu0 %983, %v814
  %v985 = vpop.permute.xlu0 %984
  %988 = vset.pattern.permute.xlu0 1
  %989 = vperm.xlu0 %988, %v815
  %v990 = vpop.permute.xlu0 %989
  %993 = vset.pattern.permute.xlu0 1
  %994 = vperm.xlu0 %993, %v816
  %v995 = vpop.permute.xlu0 %994
  %998 = vset.pattern.permute.xlu0 1
  %999 = vperm.xlu0 %998, %v817
  %v1000 = vpop.permute.xlu0 %999
  %1003 = vset.pattern.permute.xlu0 1
  %1004 = vperm.xlu0 %1003, %v818
  %v1005 = vpop.permute.xlu0 %1004
  %1008 = vset.pattern.permute.xlu0 1
  %1009 = vperm.xlu0 %1008, %v819
  %v1010 = vpop.permute.xlu0 %1009
  %1013 = vset.pattern.permute.xlu0 1
  %1014 = vperm.xlu0 %1013, %v820
  %v1015 = vpop.permute.xlu0 %1014
  %v1017 = vadd.f32 %v950, %v919
  %v1018 = vadd.f32 %v950, %v920
  %v1019 = vadd.f32 %v955, %v921
  %v1020 = vadd.f32 %v955, %v922
  %v1021 = vadd.f32 %v960, %v923
  %v1022 = vadd.f32 %v960, %v924
  %v1023 = vadd.f32 %v965, %v925
  %v1024 = vadd.f32 %v965, %v926
  %v1025 = vadd.f32 %v970, %v927
  %v1026 = vadd.f32 %v970, %v928
  %v1027 = vadd.f32 %v975, %v929
  %v1028 = vadd.f32 %v975, %v930
  %v1029 = vadd.f32 %v980, %v931
  %v1030 = vadd.f32 %v980, %v932
  %v1031 = vadd.f32 %v985, %v933
  %v1032 = vadd.f32 %v985, %v934
  %v1033 = vadd.f32 %v990, %v935
  %v1034 = vadd.f32 %v990, %v936
  %v1035 = vadd.f32 %v995, %v937
  %v1036 = vadd.f32 %v995, %v938
  %v1037 = vadd.f32 %v1000, %v939
  %v1038 = vadd.f32 %v1000, %v940
  %v1039 = vadd.f32 %v1005, %v941
  %v1040 = vadd.f32 %v1005, %v942
  %v1041 = vadd.f32 %v1010, %v943
  %v1042 = vadd.f32 %v1010, %v944
  %v1043 = vadd.f32 %v1015, %v945
  %v1044 = vadd.f32 %v1015, %v946
  %v1045 = vadd.f32 %v891, %v1017
  %v1046 = vadd.f32 %v892, %v1018
  %v1047 = vadd.f32 %v893, %v1019
  %v1048 = vadd.f32 %v894, %v1020
  %v1049 = vadd.f32 %v895, %v1021
  %v1050 = vadd.f32 %v896, %v1022
  %v1051 = vadd.f32 %v897, %v1023
  %v1052 = vadd.f32 %v898, %v1024
  %v1053 = vadd.f32 %v899, %v1025
  %v1054 = vadd.f32 %v900, %v1026
  %v1055 = vadd.f32 %v901, %v1027
  %v1056 = vadd.f32 %v902, %v1028
  %v1057 = vadd.f32 %v903, %v1029
  %v1058 = vadd.f32 %v904, %v1030
  %v1059 = vadd.f32 %v905, %v1031
  %v1060 = vadd.f32 %v906, %v1032
  %v1061 = vadd.f32 %v907, %v1033
  %v1062 = vadd.f32 %v908, %v1034
  %v1063 = vadd.f32 %v909, %v1035
  %v1064 = vadd.f32 %v910, %v1036
  %v1065 = vadd.f32 %v911, %v1037
  %v1066 = vadd.f32 %v912, %v1038
  %v1067 = vadd.f32 %v913, %v1039
  %v1068 = vadd.f32 %v914, %v1040
  %v1069 = vadd.f32 %v915, %v1041
  %v1070 = vadd.f32 %v916, %v1042
  %v1071 = vadd.f32 %v917, %v1043
  %v1072 = vadd.f32 %v918, %v1044
  %1073 = vst [vmem:[%s4] sm:$0xff] %v1045
  %1074 = vst.msk [vmem:[%s4 + $0x8] sm:$0xff] %vm484, %v1046
  %1075 = vst [vmem:[%s4 + $0x10] sm:$0xff] %v1047
  %1076 = vst.msk [vmem:[%s4 + $0x18] sm:$0xff] %vm484, %v1048
  %1077 = vst [vmem:[%s4 + $0x20] sm:$0xff] %v1049
  %1078 = vst.msk [vmem:[%s4 + $0x28] sm:$0xff] %vm484, %v1050
  %1079 = vst [vmem:[%s4 + $0x30] sm:$0xff] %v1051
  %1080 = vst.msk [vmem:[%s4 + $0x38] sm:$0xff] %vm484, %v1052
  %1081 = vst [vmem:[%s4 + $0x40] sm:$0xff] %v1053
  %1082 = vst.msk [vmem:[%s4 + $0x48] sm:$0xff] %vm484, %v1054
  %1083 = vst [vmem:[%s4 + $0x50] sm:$0xff] %v1055
  %1084 = vst.msk [vmem:[%s4 + $0x58] sm:$0xff] %vm484, %v1056
  %1085 = vst [vmem:[%s4 + $0x60] sm:$0xff] %v1057
  %1086 = vst.msk [vmem:[%s4 + $0x68] sm:$0xff] %vm484, %v1058
  %1087 = vst [vmem:[%s4 + $0x70] sm:$0xff] %v1059
  %1088 = vst.msk [vmem:[%s4 + $0x78] sm:$0xff] %vm484, %v1060
  %1089 = vst [vmem:[%s4 + $0x80] sm:$0xff] %v1061
  %1090 = vst.msk [vmem:[%s4 + $0x88] sm:$0xff] %vm484, %v1062
  %1091 = vst [vmem:[%s4 + $0x90] sm:$0xff] %v1063
  %1092 = vst.msk [vmem:[%s4 + $0x98] sm:$0xff] %vm484, %v1064
  %1093 = vst [vmem:[%s4 + $0xa0] sm:$0xff] %v1065
  %1094 = vst.msk [vmem:[%s4 + $0xa8] sm:$0xff] %vm484, %v1066
  %1095 = vst [vmem:[%s4 + $0xb0] sm:$0xff] %v1067
  %1096 = vst.msk [vmem:[%s4 + $0xb8] sm:$0xff] %vm484, %v1068
  %1097 = vst [vmem:[%s4 + $0xc0] sm:$0xff] %v1069
  %1098 = vst.msk [vmem:[%s4 + $0xc8] sm:$0xff] %vm484, %v1070
  %1099 = vst [vmem:[%s4 + $0xd0] sm:$0xff] %v1071
  %1100 = vst.msk [vmem:[%s4 + $0xd8] sm:$0xff] %vm484, %v1072
  // Predicated region
  $region18: #{_conv_bn_add_impl.1} parent=0 // pred_check
    _
  $region19: #{_conv_bn_add_impl.1} parent=0 // pred_check_branch
    %1102 = sbr.rel (0) target = $region21
  $region20: #{_conv_bn_add_impl.1} parent=0 // pred_region
    _
  $region21: #{_conv_bn_add_impl.1} parent=0 // pred_fallthru
    _
  // Predicated region
  $region22: #{_conv_bn_add_impl.1} parent=0 // pred_check
    _
  $region23: #{_conv_bn_add_impl.1} parent=0 // pred_check_branch
    %1104 = sbr.rel (0) target = $region25
  $region24: #{_conv_bn_add_impl.1} parent=0 // pred_region
    _
  $region25: #{_conv_bn_add_impl.1} parent=0 // pred_fallthru
    _

</llo_original>
